<compile_context>
chip_gen: v5e
topology: v5e:2x2
jax: 0.10.0
libtpu: 0.0.40
codegen_flags: <defaults>
</compile_context>

<pallas_src>
import math

import jax
import jax.numpy as jnp
from jax.experimental import pallas as pl
from jax.experimental.pallas import tpu as pltpu


def _round_up(a: int, b: int) -> int:
    return (a + b - 1) // b * b


def _make_phaseshift_kernel(ps_step: int):
    """Build the kernel with sin/cos phase weights baked in as constants."""
    sin_w = [math.sin(2.0 * math.pi * i / ps_step) for i in range(ps_step)]
    cos_w = [math.cos(2.0 * math.pi * i / ps_step) for i in range(ps_step)]

    def kernel(x_ref, o_ref):
        # x_ref : [S, tile_rows, 128] VMEM tile, o_ref : [tile_rows, 128]
        x0 = x_ref[0].astype(jnp.float32)
        val1 = x0 * jnp.float32(sin_w[0])
        val2 = x0 * jnp.float32(cos_w[0])
        # ps_step is small & static -> unrolled Python loop (pure VPU work).
        for i in range(1, ps_step):
            xi = x_ref[i].astype(jnp.float32)
            val1 = val1 + xi * jnp.float32(sin_w[i])
            val2 = val2 + xi * jnp.float32(cos_w[i])
        # TODO(synk): on v7x (VALU-bound regime) a manual atan2 using
        # pl.reciprocal(approx=True) + polynomial atan could trim the VALU
        # path; kept exact jnp.arctan2 here for quadrant/zero correctness.
        o_ref[...] = jnp.arctan2(val1, val2).astype(o_ref.dtype)

    return kernel


def _pick_tile_rows(rows: int, ps_step: int, in_itemsize: int,
                    vmem_budget_bytes: int = 24 << 20,
                    max_tile_rows: int = 2048) -> int:
    """Largest tile (multiple of 8 sublanes) whose double-buffered I/O fits the budget."""
    # double-buffered: 2 * (S inputs + 1 f32 output) per row of 128 lanes
    per_row_bytes = 2 * (ps_step * in_itemsize + 4) * 128
    cap = vmem_budget_bytes // per_row_bytes
    cap = max(8, min(max_tile_rows, (cap // 8) * 8))
    if rows <= 8:
        return 8
    # Prefer >= 2 grid steps so both TensorCores get work on v7x megacore.
    two_step = _round_up(pl.cdiv(rows, 2), 8)
    return min(cap, two_step)


def phaseshift_forward(pimgs: jax.Array, ps_step: int) -> jax.Array:
    """pimgs: [S, N, C, H, W] stacked phase images.  Returns [N, C, H, W] phase map."""
    S, N, C, H, W = pimgs.shape
    assert S == ps_step, "leading axis must equal ps_step"
    total = N * C * H * W

    in_itemsize = jnp.dtype(pimgs.dtype).itemsize
    rows = pl.cdiv(total, 128)
    tile_rows = _pick_tile_rows(rows, ps_step, in_itemsize)
    padded_rows = _round_up(rows, tile_rows)
    padded_total = padded_rows * 128
    grid = (padded_rows // tile_rows,)

    x = pimgs.reshape(S, total)
    if padded_total != total:
        # Zero padding is harmless: atan2(0, 0) = 0 and the tail is sliced off.
        x = jnp.pad(x, ((0, 0), (0, padded_total - total)))
    x = x.reshape(S, padded_rows, 128)

    cost = pl.CostEstimate(
        flops=4 * ps_step * padded_total,            # mul+add per step, two accumulators
        transcendentals=padded_total,                # atan2
        bytes_accessed=(ps_step * in_itemsize + 4) * padded_total,
    )

    out = pl.pallas_call(
        _make_phaseshift_kernel(ps_step),
        out_shape=jax.ShapeDtypeStruct((padded_rows, 128), jnp.float32),
        grid_spec=pltpu.PrefetchScalarGridSpec(
            num_scalar_prefetch=0,
            grid=grid,
            in_specs=[pl.BlockSpec((S, tile_rows, 128), lambda r: (0, r, 0))],
            out_specs=pl.BlockSpec((tile_rows, 128), lambda r: (r, 0)),
        ),
        compiler_params=pltpu.CompilerParams(
            dimension_semantics=("parallel",),
        ),
        cost_estimate=cost,
    )(x)

    out = out.reshape(padded_total)
    if padded_total != total:
        out = out[:total]
    return out.reshape(N, C, H, W)


def _phaseshift_reference(pimgs: jax.Array, ps_step: int) -> jax.Array:
    """Pure-JAX reference mirroring the PyTorch forward exactly."""
    p = pimgs.astype(jnp.float32)
    val1 = p[0] * jnp.float32(math.sin(2.0 * math.pi * 0 / ps_step))
    val2 = p[0] * jnp.float32(math.cos(2.0 * math.pi * 0 / ps_step))
    for i in range(1, ps_step):
        val1 = val1 + p[i] * jnp.float32(math.sin(2.0 * math.pi * i / ps_step))
        val2 = val2 + p[i] * jnp.float32(math.cos(2.0 * math.pi * i / ps_step))
    return jnp.arctan2(val1, val2)


if __name__ == "__main__":
    key = jax.random.PRNGKey(0)

    # Case 1: 128-divisible size (fast path, no padding).
    ps_step = 4
    N, C, H, W = 2, 1, 32, 32  # N*C*H*W = 2048 -> 16 rows of 128 lanes
    k1, k2 = jax.random.split(key)
    pimgs = jax.random.uniform(k1, (ps_step, N, C, H, W), dtype=jnp.float32)
    out = jax.block_until_ready(phaseshift_forward(pimgs, ps_step))
    ref = _phaseshift_reference(pimgs, ps_step)
    assert out.shape == (N, C, H, W)
    assert jnp.allclose(out, ref, atol=1e-5, rtol=1e-5), "mismatch vs reference (case 1)"

    # Case 2: non-divisible spatial size exercises the padding path.
    N2, C2, H2, W2 = 2, 3, 17, 13
    pimgs2 = jax.random.uniform(k2, (ps_step, N2, C2, H2, W2), dtype=jnp.float32)
    out2 = jax.block_until_ready(phaseshift_forward(pimgs2, ps_step))
    ref2 = _phaseshift_reference(pimgs2, ps_step)
    assert out2.shape == (N2, C2, H2, W2)
    assert jnp.allclose(out2, ref2, atol=1e-5, rtol=1e-5), "mismatch vs reference (case 2)"

    print("KERNEL_OK")
</pallas_src>

<mosaic_0001>
module attributes {stable_mosaic.version = 11 : i64} {
  func.func @kernel(%arg0: i32, %arg1: memref<4x8x128xf32, #tpu.memory_space<vmem>>, %arg2: memref<8x128xf32, #tpu.memory_space<vmem>>) attributes {dimension_semantics = [#tpu.dimension_semantics<parallel>], iteration_bounds = array<i64: 2>, scalar_prefetch = 0 : i64, scratch_operands = 0 : i64, tpu.core_type = #tpu.core_type<tc>, window_params = [{transform_indices = @transform_0, window_bounds = array<i64: 4, 8, 128>}, {transform_indices = @transform_1, window_bounds = array<i64: 8, 128>}]} {
    %c0 = arith.constant 0 : index
    %c0_0 = arith.constant 0 : index
    %c0_1 = arith.constant 0 : index
    %0 = vector.load %arg1[%c0, %c0_0, %c0_1] : memref<4x8x128xf32, #tpu.memory_space<vmem>>, vector<1x8x128xf32>
    %1 = vector.shape_cast %0 : vector<1x8x128xf32> to vector<8x128xf32>
    %cst = arith.constant 0.000000e+00 : f32
    %2 = vector.broadcast %cst : f32 to vector<8x128xf32>
    %3 = arith.mulf %1, %2 : vector<8x128xf32>
    %cst_2 = arith.constant 1.000000e+00 : f32
    %4 = vector.broadcast %cst_2 : f32 to vector<8x128xf32>
    %5 = arith.mulf %1, %4 : vector<8x128xf32>
    %c1 = arith.constant 1 : index
    %c0_3 = arith.constant 0 : index
    %c0_4 = arith.constant 0 : index
    %6 = vector.load %arg1[%c1, %c0_3, %c0_4] : memref<4x8x128xf32, #tpu.memory_space<vmem>>, vector<1x8x128xf32>
    %7 = vector.shape_cast %6 : vector<1x8x128xf32> to vector<8x128xf32>
    %cst_5 = arith.constant 1.000000e+00 : f32
    %8 = vector.broadcast %cst_5 : f32 to vector<8x128xf32>
    %9 = arith.mulf %7, %8 : vector<8x128xf32>
    %10 = arith.addf %3, %9 : vector<8x128xf32>
    %cst_6 = arith.constant 6.12323426E-17 : f32
    %11 = vector.broadcast %cst_6 : f32 to vector<8x128xf32>
    %12 = arith.mulf %7, %11 : vector<8x128xf32>
    %13 = arith.addf %5, %12 : vector<8x128xf32>
    %c2 = arith.constant 2 : index
    %c0_7 = arith.constant 0 : index
    %c0_8 = arith.constant 0 : index
    %14 = vector.load %arg1[%c2, %c0_7, %c0_8] : memref<4x8x128xf32, #tpu.memory_space<vmem>>, vector<1x8x128xf32>
    %15 = vector.shape_cast %14 : vector<1x8x128xf32> to vector<8x128xf32>
    %cst_9 = arith.constant 1.22464685E-16 : f32
    %16 = vector.broadcast %cst_9 : f32 to vector<8x128xf32>
    %17 = arith.mulf %15, %16 : vector<8x128xf32>
    %18 = arith.addf %10, %17 : vector<8x128xf32>
    %cst_10 = arith.constant -1.000000e+00 : f32
    %19 = vector.broadcast %cst_10 : f32 to vector<8x128xf32>
    %20 = arith.mulf %15, %19 : vector<8x128xf32>
    %21 = arith.addf %13, %20 : vector<8x128xf32>
    %c3 = arith.constant 3 : index
    %c0_11 = arith.constant 0 : index
    %c0_12 = arith.constant 0 : index
    %22 = vector.load %arg1[%c3, %c0_11, %c0_12] : memref<4x8x128xf32, #tpu.memory_space<vmem>>, vector<1x8x128xf32>
    %23 = vector.shape_cast %22 : vector<1x8x128xf32> to vector<8x128xf32>
    %cst_13 = arith.constant -1.000000e+00 : f32
    %24 = vector.broadcast %cst_13 : f32 to vector<8x128xf32>
    %25 = arith.mulf %23, %24 : vector<8x128xf32>
    %26 = arith.addf %18, %25 : vector<8x128xf32>
    %cst_14 = arith.constant -1.83697015E-16 : f32
    %27 = vector.broadcast %cst_14 : f32 to vector<8x128xf32>
    %28 = arith.mulf %23, %27 : vector<8x128xf32>
    %29 = arith.addf %21, %28 : vector<8x128xf32>
    %30 = math.atan2 %26, %29 : vector<8x128xf32>
    %c0_15 = arith.constant 0 : index
    %c0_16 = arith.constant 0 : index
    %31 = vector.load %arg2[%c0_15, %c0_16] : memref<8x128xf32, #tpu.memory_space<vmem>>, vector<8x128xf32>
    tpu.vector_store %arg2[%c0_15, %c0_16], %30 {strides = array<i32>} : memref<8x128xf32, #tpu.memory_space<vmem>>, vector<8x128xf32>,
    return
  }
  func.func @transform_0(%arg0: i32) -> (i32, i32, i32) {
    %c0_i32 = arith.constant 0 : i32
    %c0_i32_0 = arith.constant 0 : i32
    %c0_i32_1 = arith.constant 0 : i32
    return %c0_i32, %arg0, %c0_i32_0 : i32, i32, i32
  }
  func.func @transform_1(%arg0: i32) -> (i32, i32) {
    %c0_i32 = arith.constant 0 : i32
    %c0_i32_0 = arith.constant 0 : i32
    return %arg0, %c0_i32 : i32, i32
  }
}

</mosaic_0001>

<llo_original>
// kernel: tpu_custom_call.1
$region0: #{tpu_custom_call.1}
  #allocation0 [shape = 'u32[]', space=smem, size = 0x4, offset = 0x4, fixed_abs, tag = 'smem constant byte address 0x4 - core index']
  #allocation1 [shape = 'u32[72,128]{1,0:T(1,128)}', space=vmem, size = 0x9000, scoped, tag = 'internal scratch']
  %s0 = inlined_call_operand.hbm [shape: f32[4,16,128], index: 0, kind: input, shape index: {}]
  %s1 = inlined_call_operand.hbm [shape: f32[16,128], index: 1, kind: output, shape index: {}]
  %s2 = sld [smem:[#allocation0]]
  $region41: #{tpu_custom_call.1} parent=0
    _
  %s4 = ssub.s32 1, %s2
  %s5 = scalar_select 0, %s4, %s2
  $region1: #{tpu_custom_call.1} parent=0
    #allocation2 [shape = 'u8[32768]{0}', space=vmem, size = 0x8000, scoped, tag = 'input window, operand 0']
    #allocation3 [shape = 's32[2]{0}', space=sflag, size = 0x8, scoped, tag = 'scoped memory for tpu_custom_call.1']
    #allocation4 [shape = 's32[2]{0}', space=sflag, size = 0x8, scoped, tag = 'scoped memory for tpu_custom_call.1']
    #allocation5 [shape = 'u8[8192]{0}', space=vmem, size = 0x2000, scoped, tag = 'output window, operand 0']
    %6 = vsyncpa [#allocation3], 0
    %s7 = scalar_lea.sflag [#allocation3], 1
    %8 = vsyncpa %s7, 0
    %9 = vsyncpa [#allocation4], 0
    %s10 = scalar_lea.sflag [#allocation4], 1
    %11 = vsyncpa %s10, 0
    loop: start=0, step=1, limit=4
    $region2: #{tpu_custom_call.1} parent=1 // loop_pre_header
      _
    $region3: #{tpu_custom_call.1} parent=1 // loop_header
      %s13 = sphi 0, %s17
      %p14 = scmp.ge.s32.totalorder %s13, 4
      %s23 = sphi 0, %s25
      %s26 = sphi 0, %s23
      %s27 = sphi 0, %s26
      %s43 = sphi 0, %s27
      %s49 = sphi 0, %s51
      %s52 = sphi 0, %s49
      %s53 = sphi 0, %s52
      %s69 = sphi 0, %s53
    $region4: #{tpu_custom_call.1} parent=1 // loop_header_branch
      %16 = sbr.rel (%p14) target = $region8
    $region5: #{tpu_custom_call.1} parent=1 // loop_body
      %s18 = ssub.s32 %s13, 1
      %s19 = ssub.s32 %s13, 2
      %s20 = sadd.s32 %s13, 1
      %s21 = ssub.s32 %s13, %s20
      %p22 = scmp.eq.s32.totalorder %s21, 0
      %s24 = sadd.s32 %s23, 1
      %s25 = scalar_select %p22, %s23, %s24
      %p28 = pneg %p22
      %p29 = scmp.eq.s32.totalorder %s13, 1
      %p30 = por %p28, %p29
      %p31 = scmp.ne.s32.totalorder %s23, %s26
      %p32 = scmp.eq.s32.totalorder %s13, 0
      %p33 = por %p31, %p32
      %p34 = scmp.ne.s32.totalorder %s23, %s26
      %p35 = scmp.eq.s32.totalorder %s18, 1
      %p36 = por %p34, %p35
      %p37 = scmp.ne.s32.totalorder %s26, %s27
      %p38 = scmp.eq.s32.totalorder %s18, 0
      %p39 = por %p37, %p38
      %p40 = scmp.ne.s32.totalorder %s26, %s27
      %p41 = scmp.eq.s32.totalorder %s19, 1
      %p42 = por %p40, %p41
      %p44 = scmp.ne.s32.totalorder %s27, %s43
      %p45 = scmp.eq.s32.totalorder %s19, 0
      %p46 = por %p44, %p45
      %s47 = ssub.s32 %s13, %s20
      %p48 = scmp.eq.s32.totalorder %s47, 0
      %s50 = sadd.s32 %s49, 1
      %s51 = scalar_select %p48, %s49, %s50
      %p54 = pneg %p48
      %p55 = scmp.eq.s32.totalorder %s13, 1
      %p56 = por %p54, %p55
      %p57 = scmp.ne.s32.totalorder %s49, %s52
      %p58 = scmp.eq.s32.totalorder %s13, 0
      %p59 = por %p57, %p58
      %p60 = scmp.ne.s32.totalorder %s49, %s52
      %p61 = scmp.eq.s32.totalorder %s18, 1
      %p62 = por %p60, %p61
      %p63 = scmp.ne.s32.totalorder %s52, %s53
      %p64 = scmp.eq.s32.totalorder %s18, 0
      %p65 = por %p63, %p64
      %p66 = scmp.ne.s32.totalorder %s52, %s53
      %p67 = scmp.eq.s32.totalorder %s19, 1
      %p68 = por %p66, %p67
      %p70 = scmp.ne.s32.totalorder %s53, %s69
      %p71 = scmp.eq.s32.totalorder %s19, 0
      %p72 = por %p70, %p71
      %p73 = scmp.le.s32.totalorder 1, %s13
      %p74 = scmp.lt.s32.totalorder %s13, 3
      %p75 = pnand %p73, %p74
      %p76 = pneg %p75
      // Predicated region
      $region9: #{tpu_custom_call.1} parent=5 // pred_check
        _
      $region10: #{tpu_custom_call.1} parent=5 // pred_check_branch
        %78 = sbr.rel (%p75) target = $region12
      $region11: #{tpu_custom_call.1} parent=5 // pred_region
        %s79 = ssub.s32 %s13, 1
      $region12: #{tpu_custom_call.1} parent=5 // pred_fallthru
        _
      %p80 = scmp.lt.s32.totalorder %s13, 2
      // Predicated region
      $region13: #{tpu_custom_call.1} parent=5 // pred_check
        %p81 = pneg %p80
      $region14: #{tpu_custom_call.1} parent=5 // pred_check_branch
        %83 = sbr.rel (%p81) target = $region16
      $region15: #{tpu_custom_call.1} parent=5 // pred_region
        // Predicated region
        $region17: #{tpu_custom_call.1} parent=15 // pred_check
          %p84 = pneg %p33
        $region18: #{tpu_custom_call.1} parent=15 // pred_check_branch
          %86 = sbr.rel (%p84) target = $region20
        $region19: #{tpu_custom_call.1} parent=15 // pred_region
          %s87 = sand.u32 %s23, 1
          %s88 = scalar_lea.sflag [#allocation3], %s87
          %s89 = sand.u32 %s23, 1
          %s90 = smul.addr %s89, 32
          %s91 = scalar_lea.vmem [#allocation2], %s90
          %93 = vsyncadd %s88, 0
          %s94 = smul.addr %s13, 8
          %s95 = scalar_lea.hbm %s0, %s94
          %s96 = sshll.u32 %s95, 4
          %s97 = int_to_ptr.hbm [resolvable:$true] %s96
          %s98 = sshll.u32 %s91, 4
          %s99 = int_to_ptr.vmem [resolvable:$true] %s98
          %104 = dma.hbm_to_vmem [thread:$0]  %s97, 512, %s99, %s88, 256, 128, 8
        $region20: #{tpu_custom_call.1} parent=15 // pred_fallthru
          _
      $region16: #{tpu_custom_call.1} parent=5 // pred_fallthru
        _
      %p105 = scmp.le.s32.totalorder 1, %s13
      %p106 = scmp.lt.s32.totalorder %s13, 3
      %p107 = pnand %p105, %p106
      %p108 = pneg %p107
      // Predicated region
      $region21: #{tpu_custom_call.1} parent=5 // pred_check
        _
      $region22: #{tpu_custom_call.1} parent=5 // pred_check_branch
        %110 = sbr.rel (%p107) target = $region24
      $region23: #{tpu_custom_call.1} parent=5 // pred_region
        %s111 = ssub.s32 %s13, 1
        %s112 = sand.u32 %s26, 1
        %s113 = scalar_lea.sflag [#allocation3], %s112
        %s114 = sand.u32 %s26, 1
        %s115 = smul.addr %s114, 32
        %s116 = scalar_lea.vmem [#allocation2], %s115
        // Predicated region
        $region25: #{tpu_custom_call.1} parent=23 // pred_check
          %p117 = pneg %p39
        $region26: #{tpu_custom_call.1} parent=23 // pred_check_branch
          %119 = sbr.rel (%p117) target = $region28
        $region27: #{tpu_custom_call.1} parent=23 // pred_region
          %121 = dma.done %s113, 512
        $region28: #{tpu_custom_call.1} parent=23 // pred_fallthru
          _
        %s122 = sand.u32 %s26, 1
        %s123 = scalar_lea.sflag [#allocation3], %s122
        %s124 = sand.u32 %s26, 1
        %s125 = smul.addr %s124, 32
        %s126 = scalar_lea.vmem [#allocation2], %s125
        %p127 = pneg %p39
        %p128 = pneg %p36
        %p129 = pneg %p65
        %p130 = pneg %p62
        %s131 = sand.u32 %s52, 1
        %s132 = scalar_lea.sflag [#allocation4], %s131
        %s133 = sand.u32 %s52, 1
        %s134 = smul.addr %s133, 8
        %s135 = scalar_lea.vmem [#allocation5], %s134
        %v136 = vld [vmem:[%s116] sm:$0xff]
        %v137 = vmul.f32 %v136, 0.0
        %s138 = scalar_lea.vmem %s116, 8 [#allocation2]
        %v139 = vld [vmem:[%s138] sm:$0xff]
        %v140 = vadd.f32 %v137, %v139
        %v141 = vmul.f32 %v139, 6.123234e-17
        %v142 = vadd.f32 %v136, %v141
        %s143 = scalar_lea.vmem %s116, 16 [#allocation2]
        %v144 = vld [vmem:[%s143] sm:$0xff]
        %v145 = vmul.f32 %v144, 1.2246469e-16
        %v146 = vadd.f32 %v140, %v145
        %v147 = vmul.f32 %v144, -1.0
        %v148 = vadd.f32 %v142, %v147
        %s149 = scalar_lea.vmem %s116, 24 [#allocation2]
        %v150 = vld [vmem:[%s149] sm:$0xff]
        %v151 = vmul.f32 %v150, -1.0
        %v152 = vadd.f32 %v146, %v151
        %v153 = vmul.f32 %v150, -1.8369701e-16
        %v154 = vadd.f32 %v148, %v153
        %v155 = vand.u32 2147483647, %v154
        %v156 = vand.u32 2147483647, %v152
        %v157 = vmin.f32 %v155, %v156
        %v158 = vmax.f32 %v155, %v156
        %v159 = vrcp.pop %v158
        %v160 = vmul.f32 %v158, %v159
        %v161 = vsub.f32 1.0, %v160
        %v162 = vmul.f32 %v159, %v161
        %v163 = vadd.f32 %v159, %v162
        %vm164 = vweird.f32 %v158
        %vm165 = vweird.f32 %v159
        %vm166 = vmor %vm164, %vm165
        %v167 = vsel %vm166, %v159, %v163
        %v168 = vand.u32 2147483647, %v158
        %vm169 = vcmp.eq.f32.partialorder %v168, 8.507059e+37
        %v170 = vand.u32 %v158, 2147483648
        %v171 = vor.u32 1.1754944e-38, %v170
        %v172 = vsel %vm169, %v171, %v167
        %v173 = vmul.f32 %v157, %v172
        %v174 = vmul.f32 %v173, %v173
        %v175 = vmul.f32 0.002785687, %v174
        %v176 = vadd.f32 %v175, -0.015866
        %v177 = vmul.f32 %v176, %v174
        %v178 = vadd.f32 %v177, 0.04247222
        %v179 = vmul.f32 %v178, %v174
        %v180 = vadd.f32 %v179, -0.074975304
        %v181 = vmul.f32 %v180, %v174
        %v182 = vadd.f32 %v181, 0.1064488
        %v183 = vmul.f32 %v182, %v174
        %v184 = vadd.f32 %v183, -0.14207031
        %v185 = vmul.f32 %v184, %v174
        %v186 = vadd.f32 %v185, 0.19993454
        %v187 = vmul.f32 %v186, %v174
        %v188 = vadd.f32 %v187, -0.33333147
        %v189 = vmul.f32 %v188, %v174
        %v190 = vmul.f32 %v189, %v173
        %v191 = vadd.f32 %v190, %v173
        %vm192 = vcmp.gt.f32.partialorder %v156, %v155
        %v193 = vsub.f32 1.5707964, %v191
        %v194 = vsel %vm192, %v193, %v191
        %vm195 = vcmp.lt.f32.partialorder %v154, 0.0
        %v196 = vsub.f32 3.1415927, %v194
        %v197 = vsel %vm195, %v196, %v194
        %vm198 = vcmp.lt.s32.totalorder %v154, 0
        %v199 = vsel %vm198, 3.1415927, 0.0
        %vm200 = vcmp.eq.f32.partialorder %v152, 0.0
        %v201 = vsel %vm200, %v199, %v197
        %vm202 = vcmp.ne.f32.partialorder %v154, %v154
        %vm203 = vcmp.ne.f32.partialorder %v152, %v152
        %vm204 = vmor %vm202, %vm203
        %v205 = vsel %vm204, nan, %v201
        %vm206 = vcmp.lt.f32.partialorder %v154, 0.0
        %v207 = vsel %vm206, 2.3561945, 0.7853982
        %vm208 = vcmp.eq.s32.totalorder %v155, inf
        %vm209 = vcmp.eq.s32.totalorder %v156, inf
        %vm210 = vmand %vm208, %vm209
        %v211 = vsel %vm210, %v207, %v205
        %v212 = vand.u32 2147483647, %v211
        %v213 = vand.u32 %v152, 2147483648
        %v214 = vor.u32 %v212, %v213
        %215 = vst [vmem:[%s135] sm:$0xff] %v214
        %s216 = sand.u32 %s52, 1
        %s217 = scalar_lea.sflag [#allocation4], %s216
        %s218 = sand.u32 %s52, 1
        %s219 = smul.addr %s218, 8
        %s220 = scalar_lea.vmem [#allocation5], %s219
        // Predicated region
        $region29: #{tpu_custom_call.1} parent=23 // pred_check
          %p221 = pneg %p62
        $region30: #{tpu_custom_call.1} parent=23 // pred_check_branch
          %223 = sbr.rel (%p221) target = $region32
        $region31: #{tpu_custom_call.1} parent=23 // pred_region
          %225 = vsyncadd %s217, 0
          %s226 = smul.addr %s18, 8
          %s227 = scalar_lea.hbm %s1, %s226
          %s229 = sshll.u32 %s220, 4
          %s230 = int_to_ptr.vmem [resolvable:$true] %s229
          %s231 = sshll.u32 %s227, 4
          %s232 = int_to_ptr.hbm [resolvable:$true] %s231
          %234 = dma.vmem_to_hbm [thread:$0]  %s230, 128, %s232, %s217
        $region32: #{tpu_custom_call.1} parent=23 // pred_fallthru
          _
      $region24: #{tpu_custom_call.1} parent=5 // pred_fallthru
        _
      %p235 = scmp.le.s32.totalorder 2, %s13
      // Predicated region
      $region33: #{tpu_custom_call.1} parent=5 // pred_check
        %p236 = pneg %p235
      $region34: #{tpu_custom_call.1} parent=5 // pred_check_branch
        %238 = sbr.rel (%p236) target = $region36
      $region35: #{tpu_custom_call.1} parent=5 // pred_region
        %s239 = ssub.s32 %s13, 2
        // Predicated region
        $region37: #{tpu_custom_call.1} parent=35 // pred_check
          %p240 = pneg %p68
        $region38: #{tpu_custom_call.1} parent=35 // pred_check_branch
          %242 = sbr.rel (%p240) target = $region40
        $region39: #{tpu_custom_call.1} parent=35 // pred_region
          %s243 = sand.u32 %s53, 1
          %s244 = scalar_lea.sflag [#allocation4], %s243
          %s245 = sand.u32 %s53, 1
          %s246 = smul.addr %s245, 8
          %s247 = scalar_lea.vmem [#allocation5], %s246
          %249 = dma.done %s244, 128
        $region40: #{tpu_custom_call.1} parent=35 // pred_fallthru
          _
      $region36: #{tpu_custom_call.1} parent=5 // pred_fallthru
        _
    $region6: #{tpu_custom_call.1} parent=1 // loop_footer
      %s17 = sadd.s32 1, %s13
    $region7: #{tpu_custom_call.1} parent=1 // loop_footer_branch
      %12 = sbr.rel target = $region3
    $region8: #{tpu_custom_call.1} parent=1 // loop_exit
      _
    %250 = vsyncpa [#allocation3], 1
    %s251 = scalar_lea.sflag [#allocation3], 1
    %252 = vsyncpa %s251, 1
    %253 = vsyncpa [#allocation4], 1
    %s254 = scalar_lea.sflag [#allocation4], 1
    %255 = vsyncpa %s254, 1

</llo_original>
